<compile_context>
chip_gen: v5e
topology: v5e:2x2
jax: 0.10.0
libtpu: 0.0.40
codegen_flags: <defaults>
</compile_context>

<pallas_src>
from functools import partial

import jax
import jax.numpy as jnp
from jax.experimental import pallas as pl
from jax.experimental.pallas import tpu as pltpu

HALO = 128  # lane-aligned halo width per side; must satisfy nums * pad <= HALO


def res2_kernel(xm_ref, hl_ref, hr_ref, w_ref, bns_ref, bnb_ref, o_ref,
                stk_ref, *, nums, width, channels, ksize, dilation, pad,
                length, tl):
    """One (batch, time-tile) grid step: all `nums` splits over a haloed window."""
    tw = tl + 2 * HALO
    t = pl.program_id(1)

    # Global time index of every column of the haloed window. Columns outside
    # [0, length) are (a) the conv's implicit zero padding and (b) whatever
    # garbage partial / clamped block reads returned -- one mask handles both.
    col = jax.lax.broadcasted_iota(jnp.int32, (1, tw), 1) + (t * tl - HALO)
    valid = jnp.logical_and(col >= 0, col < length)                 # (1, TW)
    valid_w = jnp.broadcast_to(valid, (width, tw))                  # hoisted

    mm_dtype = xm_ref.dtype  # keep MXU operands in the input dtype (bf16-friendly)

    sp = None
    for i in range(nums):
        lo, hi = i * width, (i + 1) * width

        # Haloed (W, TW) window of this split's input chunk; all three pieces
        # are 128-lane / 8-sublane aligned.
        chunk = jnp.concatenate(
            [hl_ref[lo:hi, :], xm_ref[lo:hi, :], hr_ref[lo:hi, :]],
            axis=-1)                                                 # (W, TW)

        base = (chunk.astype(jnp.float32) if i == 0
                else sp + chunk.astype(jnp.float32))
        # Re-impose conv zero padding / kill out-of-range columns.
        sp_in = jnp.where(valid_w, base, 0.0).astype(mm_dtype)

        # K shifted taps via lane rotation (XLU slot, no misaligned slices),
        # written into a reused VMEM scratch. Wrap-around only pollutes the
        # window edges (<= nums*pad <= HALO columns), discarded below.
        for k in range(ksize):
            shift = (pad - k * dilation) % tw
            tap = sp_in if shift == 0 else pltpu.roll(sp_in, shift, axis=1)
            stk_ref[k * width:(k + 1) * width, :] = tap

        # Single fused MXU matmul per split: (W, K*W) x (K*W, TW), f32 acc.
        acc = jnp.dot(w_ref[i], stk_ref[...],
                      preferred_element_type=jnp.float32)            # (W, TW)

        # ReLU + folded inference-mode BatchNorm (per-channel scale/shift).
        sp = jnp.maximum(acc, 0.0) * bns_ref[lo:hi, :] + bnb_ref[lo:hi, :]

        # Only the central TL columns of the window are exact -> store those.
        # (Columns past `length` in the last tile are clipped by Pallas.)
        o_ref[lo:hi, :] = sp[:, HALO:HALO + tl].astype(o_ref.dtype)

    # Pass-through last split (only when scale != 1).
    if nums * width < channels:
        o_ref[nums * width:, :] = xm_ref[nums * width:, :]


def res2conv1d_relu_bn(x, w, gamma, beta, mean, var, *,
                       scale, ksize, dilation, pad, eps=1e-5, tl=None):
    N, C, L = x.shape
    assert C % scale == 0, f"{C} % {scale} != 0"
    width = C // scale
    nums = scale if scale == 1 else scale - 1
    assert w.shape == (nums, ksize, width, width)
    assert pad == dilation * (ksize - 1) // 2, (
        "pad must equal dilation*(ksize-1)//2 so that L_out == L "
        "(required for the channel concat)")
    assert width % 8 == 0, "split width must be a multiple of 8 (f32 sublane tile)"
    assert nums * pad <= HALO, "receptive field of the split chain exceeds the halo"

    if tl is None:
        # Big lane-dense time tile: halo overhead 2*HALO/tl, per-step overhead
        # amortized. 2048 f32 @ C=512 stays well under 64 MiB VMEM (v7x-safe).
        tl = min(2048, pl.cdiv(L, 128) * 128)
    assert tl % 128 == 0
    T = pl.cdiv(L, tl)
    tw = tl + 2 * HALO
    r = tl // HALO                      # halo blocks per time tile
    hb_last = pl.cdiv(L, HALO) - 1      # last valid HALO-block index along L

    mm_dtype = x.dtype

    # ---- host-side prep (small): fused weights + folded BN -----------------
    # (nums, K, O, I) -> (nums, O, K*I): one MXU matmul per split.
    w_fused = jnp.transpose(w, (0, 2, 1, 3)).reshape(
        nums, width, ksize * width).astype(mm_dtype)
    bn_scale = (gamma * jax.lax.rsqrt(var + eps)).astype(jnp.float32)
    bn_shift = (beta - mean * bn_scale).astype(jnp.float32)
    bn_scale = bn_scale.reshape(nums * width, 1)
    bn_shift = bn_shift.reshape(nums * width, 1)

    kernel = partial(res2_kernel, nums=nums, width=width, channels=C,
                     ksize=ksize, dilation=dilation, pad=pad, length=L, tl=tl)

    # VMEM budget: double-buffered in/out blocks + constants + taps scratch
    # + a few (W, TW) f32 temporaries; capped at 64 MiB (v7x has 64 MiB / TC;
    # on v5e/v6e this can be raised toward ~96-112 MiB with a bigger tl).
    itm = jnp.dtype(x.dtype).itemsize
    block_bytes = (C * tl + 2 * C * HALO + C * tl) * itm
    const_bytes = w_fused.size * itm + (bn_scale.size + bn_shift.size) * 4
    scratch_bytes = ksize * width * tw * itm
    tmp_bytes = 8 * width * tw * 4
    vmem_limit = int(min(max(2 * (2 * block_bytes + 2 * const_bytes)
                             + scratch_bytes + tmp_bytes,
                             32 * 1024 * 1024),
                         64 * 1024 * 1024))

    flops = int(2 * N * nums * width * ksize * width * L)
    bytes_accessed = int(x.size * itm * 2 + N * C * T * 2 * HALO * itm
                         + w_fused.size * itm
                         + (bn_scale.size + bn_shift.size) * 4)

    out = pl.pallas_call(
        kernel,
        out_shape=jax.ShapeDtypeStruct((N, C, L), x.dtype),
        grid_spec=pltpu.PrefetchScalarGridSpec(
            num_scalar_prefetch=0,
            grid=(N, T),
            in_specs=[
                # main (C, TL) tile of x
                pl.BlockSpec((pl.Squeezed(), C, tl), lambda n, t: (n, 0, t)),
                # left 128-col halo, read straight from x (clamped at t==0;
                # the clamped columns are masked in-kernel)
                pl.BlockSpec((pl.Squeezed(), C, HALO),
                             lambda n, t: (n, 0, jnp.maximum(t * r - 1, 0))),
                # right 128-col halo (clamped at the sequence end; masked)
                pl.BlockSpec((pl.Squeezed(), C, HALO),
                             lambda n, t: (n, 0, jnp.minimum((t + 1) * r, hb_last))),
                pl.BlockSpec((nums, width, ksize * width), lambda n, t: (0, 0, 0)),
                pl.BlockSpec((nums * width, 1), lambda n, t: (0, 0)),
                pl.BlockSpec((nums * width, 1), lambda n, t: (0, 0)),
            ],
            out_specs=pl.BlockSpec((pl.Squeezed(), C, tl), lambda n, t: (n, 0, t)),
            scratch_shapes=[pltpu.VMEM((ksize * width, tw), mm_dtype)],
        ),
        compiler_params=pltpu.CompilerParams(
            dimension_semantics=("parallel", "parallel"),
            vmem_limit_bytes=vmem_limit),
        cost_estimate=pl.CostEstimate(flops=flops, transcendentals=0,
                                      bytes_accessed=bytes_accessed),
    )(x, x, x, w_fused, bn_scale, bn_shift)

    return out


def reference_forward(x, w, gamma, beta, mean, var, *,
                      scale, ksize, dilation, pad, eps=1e-5):
    """Pure-JAX replica of the PyTorch forward (inference-mode BN)."""
    N, C, L = x.shape
    width = C // scale
    nums = scale if scale == 1 else scale - 1
    spx = [x[:, i * width:(i + 1) * width, :] for i in range(scale)]
    out = []
    sp = None
    for i in range(nums):
        sp = spx[i] if i == 0 else sp + spx[i]
        wi = jnp.transpose(w[i], (1, 2, 0))  # (K, O, I) -> (O, I, K)
        y = jax.lax.conv_general_dilated(
            sp, wi, window_strides=(1,), padding=[(pad, pad)],
            rhs_dilation=(dilation,),
            dimension_numbers=('NCH', 'OIH', 'NCH'),
            precision=jax.lax.Precision.HIGHEST)
        y = jnp.maximum(y, 0.0)
        inv_std = jax.lax.rsqrt(var[i] + eps)
        y = (y - mean[i][None, :, None]) * (gamma[i] * inv_std)[None, :, None] \
            + beta[i][None, :, None]
        out.append(y)
        sp = y
    if scale != 1:
        out.append(spx[nums])
    return jnp.concatenate(out, axis=1)


if __name__ == "__main__":
    key = jax.random.PRNGKey(0)

    # Two small configs: (A) multi-tile L (exercises halos + clamped halo
    # indices + partial last block), (B) single tile, dilation > 1, L not a
    # multiple of 128 (exercises block-larger-than-array clipping).
    configs = [
        dict(N=2, C=32, L=320, scale=4, ksize=3, dilation=1, pad=1, tl=128),
        dict(N=2, C=32, L=200, scale=4, ksize=3, dilation=2, pad=2, tl=None),
    ]

    for idx, cfg in enumerate(configs):
        N, C, L = cfg["N"], cfg["C"], cfg["L"]
        SCALE, KSIZE = cfg["scale"], cfg["ksize"]
        DIL, PAD = cfg["dilation"], cfg["pad"]
        WIDTH = C // SCALE
        NUMS = SCALE if SCALE == 1 else SCALE - 1

        key, kx, kw, kg, kb, km, kv = jax.random.split(key, 7)
        x = jax.random.normal(kx, (N, C, L), dtype=jnp.float32)
        # Conv1d weights: (nums, K, W_out, W_in), bias=False.
        w = 0.1 * jax.random.normal(kw, (NUMS, KSIZE, WIDTH, WIDTH),
                                    dtype=jnp.float32)
        # BatchNorm1d params / running stats (deterministic, non-trivial).
        gamma = 0.5 + jax.random.uniform(kg, (NUMS, WIDTH), dtype=jnp.float32)
        beta = 0.1 * jax.random.normal(kb, (NUMS, WIDTH), dtype=jnp.float32)
        run_mean = 0.1 * jax.random.normal(km, (NUMS, WIDTH), dtype=jnp.float32)
        run_var = 0.5 + jax.random.uniform(kv, (NUMS, WIDTH), dtype=jnp.float32)

        out = res2conv1d_relu_bn(x, w, gamma, beta, run_mean, run_var,
                                 scale=SCALE, ksize=KSIZE, dilation=DIL,
                                 pad=PAD, tl=cfg["tl"])
        out = jax.block_until_ready(out)

        ref = reference_forward(x, w, gamma, beta, run_mean, run_var,
                                scale=SCALE, ksize=KSIZE, dilation=DIL, pad=PAD)
        ref = jax.block_until_ready(ref)

        assert out.shape == (N, C, L)
        err = float(jnp.max(jnp.abs(out - ref)))
        assert jnp.allclose(out, ref, atol=1e-2, rtol=1e-2), \
            f"config {idx}: max abs err = {err}"

    print("KERNEL_OK")
</pallas_src>

<mosaic_0001>
module attributes {stable_mosaic.version = 11 : i64} {
  func.func @res2_kernel(%arg0: i32, %arg1: i32, %arg2: memref<1x32x128xf32, #tpu.memory_space<vmem>>, %arg3: memref<1x32x128xf32, #tpu.memory_space<vmem>>, %arg4: memref<1x32x128xf32, #tpu.memory_space<vmem>>, %arg5: memref<3x8x24xf32, #tpu.memory_space<vmem>>, %arg6: memref<24x1xf32, #tpu.memory_space<vmem>>, %arg7: memref<24x1xf32, #tpu.memory_space<vmem>>, %arg8: memref<1x32x128xf32, #tpu.memory_space<vmem>>, %arg9: memref<24x384xf32, #tpu.memory_space<vmem>>) attributes {dimension_semantics = [#tpu.dimension_semantics<parallel>, #tpu.dimension_semantics<parallel>], iteration_bounds = array<i64: 2, 3>, scalar_prefetch = 0 : i64, scratch_operands = 1 : i64, tpu.core_type = #tpu.core_type<tc>, window_params = [{transform_indices = @transform_0, window_bounds = array<i64: 1, 32, 128>}, {transform_indices = @transform_1, window_bounds = array<i64: 1, 32, 128>}, {transform_indices = @transform_2, window_bounds = array<i64: 1, 32, 128>}, {pipeline_mode = #tpu.pipeline_mode<synchronous>, transform_indices = @transform_3, window_bounds = array<i64: 3, 8, 24>}, {pipeline_mode = #tpu.pipeline_mode<synchronous>, transform_indices = @transform_4, window_bounds = array<i64: 24, 1>}, {pipeline_mode = #tpu.pipeline_mode<synchronous>, transform_indices = @transform_5, window_bounds = array<i64: 24, 1>}, {transform_indices = @transform_6, window_bounds = array<i64: 1, 32, 128>}]} {
    %0 = tpu.iota {dimensions = array<i32: 1>} : vector<1x384xi32>
    %c128_i32 = arith.constant 128 : i32
    %1 = arith.muli %arg1, %c128_i32 : i32
    %c128_i32_0 = arith.constant 128 : i32
    %2 = arith.subi %1, %c128_i32_0 : i32
    %3 = vector.broadcast %2 : i32 to vector<1x384xi32>
    %4 = arith.addi %0, %3 : vector<1x384xi32>
    %c0_i32 = arith.constant 0 : i32
    %5 = vector.broadcast %c0_i32 : i32 to vector<1x384xi32>
    %6 = arith.cmpi sge, %4, %5 : vector<1x384xi32>
    %c320_i32 = arith.constant 320 : i32
    %7 = vector.broadcast %c320_i32 : i32 to vector<1x384xi32>
    %8 = arith.cmpi slt, %4, %7 : vector<1x384xi32>
    %9 = arith.andi %6, %8 : vector<1x384xi1>
    %10 = vector.shape_cast %9 : vector<1x384xi1> to vector<1x384xi1>
    %11 = vector.broadcast %10 : vector<1x384xi1> to vector<8x384xi1>
    %c0 = arith.constant 0 : index
    %c0_1 = arith.constant 0 : index
    %c0_2 = arith.constant 0 : index
    %12 = vector.load %arg3[%c0, %c0_1, %c0_2] : memref<1x32x128xf32, #tpu.memory_space<vmem>>, vector<1x8x128xf32>
    %13 = vector.shape_cast %12 : vector<1x8x128xf32> to vector<8x128xf32>
    %c0_3 = arith.constant 0 : index
    %c0_4 = arith.constant 0 : index
    %c0_5 = arith.constant 0 : index
    %14 = vector.load %arg2[%c0_3, %c0_4, %c0_5] : memref<1x32x128xf32, #tpu.memory_space<vmem>>, vector<1x8x128xf32>
    %15 = vector.shape_cast %14 : vector<1x8x128xf32> to vector<8x128xf32>
    %c0_6 = arith.constant 0 : index
    %c0_7 = arith.constant 0 : index
    %c0_8 = arith.constant 0 : index
    %16 = vector.load %arg4[%c0_6, %c0_7, %c0_8] : memref<1x32x128xf32, #tpu.memory_space<vmem>>, vector<1x8x128xf32>
    %17 = vector.shape_cast %16 : vector<1x8x128xf32> to vector<8x128xf32>
    %18 = tpu.concatenate %13, %15, %17 in 1 : vector<8x128xf32>, vector<8x128xf32>, vector<8x128xf32> -> vector<8x384xf32>
    %cst = arith.constant 0.000000e+00 : f32
    %19 = vector.broadcast %cst : f32 to vector<8x384xf32>
    %20 = arith.select %11, %18, %19 : vector<8x384xi1>, vector<8x384xf32>
    %c1_i32 = arith.constant 1 : i32
    %21 = tpu.dynamic_rotate %20 by %c1_i32 dim 1 : vector<8x384xf32>, i32 -> vector<8x384xf32>
    %c0_9 = arith.constant 0 : index
    %c0_10 = arith.constant 0 : index
    %22 = vector.load %arg9[%c0_9, %c0_10] : memref<24x384xf32, #tpu.memory_space<vmem>>, vector<8x384xf32>
    tpu.vector_store %arg9[%c0_9, %c0_10], %21 {strides = array<i32>} : memref<24x384xf32, #tpu.memory_space<vmem>>, vector<8x384xf32>,
    %c8 = arith.constant 8 : index
    %c0_11 = arith.constant 0 : index
    %23 = vector.load %arg9[%c8, %c0_11] : memref<24x384xf32, #tpu.memory_space<vmem>>, vector<8x384xf32>
    tpu.vector_store %arg9[%c8, %c0_11], %20 {strides = array<i32>} : memref<24x384xf32, #tpu.memory_space<vmem>>, vector<8x384xf32>,
    %c383_i32 = arith.constant 383 : i32
    %24 = tpu.dynamic_rotate %20 by %c383_i32 dim 1 : vector<8x384xf32>, i32 -> vector<8x384xf32>
    %c16 = arith.constant 16 : index
    %c0_12 = arith.constant 0 : index
    %25 = vector.load %arg9[%c16, %c0_12] : memref<24x384xf32, #tpu.memory_space<vmem>>, vector<8x384xf32>
    tpu.vector_store %arg9[%c16, %c0_12], %24 {strides = array<i32>} : memref<24x384xf32, #tpu.memory_space<vmem>>, vector<8x384xf32>,
    %c0_13 = arith.constant 0 : index
    %c0_14 = arith.constant 0 : index
    %c0_15 = arith.constant 0 : index
    %26 = vector.load %arg5[%c0_13, %c0_14, %c0_15] : memref<3x8x24xf32, #tpu.memory_space<vmem>>, vector<1x8x24xf32>
    %27 = vector.shape_cast %26 : vector<1x8x24xf32> to vector<8x24xf32>
    %c0_16 = arith.constant 0 : index
    %c0_17 = arith.constant 0 : index
    %28 = vector.load %arg9[%c0_16, %c0_17] : memref<24x384xf32, #tpu.memory_space<vmem>>, vector<24x384xf32>
    %cst_18 = arith.constant dense<0.000000e+00> : vector<8x384xf32>
    %29 = tpu.matmul %27, %28, %cst_18 {dimension_numbers = #tpu.dot_dimension_numbers<[1], [0], [0], [1], [0, 0, 1, 1], [], []>} : vector<8x24xf32>, vector<24x384xf32>, vector<8x384xf32> -> vector<8x384xf32>
    %cst_19 = arith.constant 0.000000e+00 : f32
    %30 = vector.broadcast %cst_19 : f32 to vector<8x384xf32>
    %31 = arith.maximumf %29, %30 : vector<8x384xf32>
    %c0_20 = arith.constant 0 : index
    %c0_21 = arith.constant 0 : index
    %32 = vector.load %arg6[%c0_20, %c0_21] : memref<24x1xf32, #tpu.memory_space<vmem>>, vector<8x1xf32>
    %33 = vector.broadcast %32 : vector<8x1xf32> to vector<8x384xf32>
    %34 = arith.mulf %31, %33 : vector<8x384xf32>
    %c0_22 = arith.constant 0 : index
    %c0_23 = arith.constant 0 : index
    %35 = vector.load %arg7[%c0_22, %c0_23] : memref<24x1xf32, #tpu.memory_space<vmem>>, vector<8x1xf32>
    %36 = vector.broadcast %35 : vector<8x1xf32> to vector<8x384xf32>
    %37 = arith.addf %34, %36 : vector<8x384xf32>
    %38 = vector.extract_strided_slice %37 {offsets = [0, 128], sizes = [8, 128], strides = [1, 1]} : vector<8x384xf32> to vector<8x128xf32>
    %c0_24 = arith.constant 0 : index
    %c0_25 = arith.constant 0 : index
    %c0_26 = arith.constant 0 : index
    %39 = vector.load %arg8[%c0_24, %c0_25, %c0_26] : memref<1x32x128xf32, #tpu.memory_space<vmem>>, vector<1x8x128xf32>
    %40 = vector.shape_cast %39 : vector<1x8x128xf32> to vector<8x128xf32>
    %41 = vector.shape_cast %38 : vector<8x128xf32> to vector<1x8x128xf32>
    tpu.vector_store %arg8[%c0_24, %c0_25, %c0_26], %41 {strides = array<i32>} : memref<1x32x128xf32, #tpu.memory_space<vmem>>, vector<1x8x128xf32>,
    %c0_27 = arith.constant 0 : index
    %c8_28 = arith.constant 8 : index
    %c0_29 = arith.constant 0 : index
    %42 = vector.load %arg3[%c0_27, %c8_28, %c0_29] : memref<1x32x128xf32, #tpu.memory_space<vmem>>, vector<1x8x128xf32>
    %43 = vector.shape_cast %42 : vector<1x8x128xf32> to vector<8x128xf32>
    %c0_30 = arith.constant 0 : index
    %c8_31 = arith.constant 8 : index
    %c0_32 = arith.constant 0 : index
    %44 = vector.load %arg2[%c0_30, %c8_31, %c0_32] : memref<1x32x128xf32, #tpu.memory_space<vmem>>, vector<1x8x128xf32>
    %45 = vector.shape_cast %44 : vector<1x8x128xf32> to vector<8x128xf32>
    %c0_33 = arith.constant 0 : index
    %c8_34 = arith.constant 8 : index
    %c0_35 = arith.constant 0 : index
    %46 = vector.load %arg4[%c0_33, %c8_34, %c0_35] : memref<1x32x128xf32, #tpu.memory_space<vmem>>, vector<1x8x128xf32>
    %47 = vector.shape_cast %46 : vector<1x8x128xf32> to vector<8x128xf32>
    %48 = tpu.concatenate %43, %45, %47 in 1 : vector<8x128xf32>, vector<8x128xf32>, vector<8x128xf32> -> vector<8x384xf32>
    %49 = arith.addf %37, %48 : vector<8x384xf32>
    %cst_36 = arith.constant 0.000000e+00 : f32
    %50 = vector.broadcast %cst_36 : f32 to vector<8x384xf32>
    %51 = arith.select %11, %49, %50 : vector<8x384xi1>, vector<8x384xf32>
    %c1_i32_37 = arith.constant 1 : i32
    %52 = tpu.dynamic_rotate %51 by %c1_i32_37 dim 1 : vector<8x384xf32>, i32 -> vector<8x384xf32>
    %c0_38 = arith.constant 0 : index
    %c0_39 = arith.constant 0 : index
    %53 = vector.load %arg9[%c0_38, %c0_39] : memref<24x384xf32, #tpu.memory_space<vmem>>, vector<8x384xf32>
    tpu.vector_store %arg9[%c0_38, %c0_39], %52 {strides = array<i32>} : memref<24x384xf32, #tpu.memory_space<vmem>>, vector<8x384xf32>,
    %c8_40 = arith.constant 8 : index
    %c0_41 = arith.constant 0 : index
    %54 = vector.load %arg9[%c8_40, %c0_41] : memref<24x384xf32, #tpu.memory_space<vmem>>, vector<8x384xf32>
    tpu.vector_store %arg9[%c8_40, %c0_41], %51 {strides = array<i32>} : memref<24x384xf32, #tpu.memory_space<vmem>>, vector<8x384xf32>,
    %c383_i32_42 = arith.constant 383 : i32
    %55 = tpu.dynamic_rotate %51 by %c383_i32_42 dim 1 : vector<8x384xf32>, i32 -> vector<8x384xf32>
    %c16_43 = arith.constant 16 : index
    %c0_44 = arith.constant 0 : index
    %56 = vector.load %arg9[%c16_43, %c0_44] : memref<24x384xf32, #tpu.memory_space<vmem>>, vector<8x384xf32>
    tpu.vector_store %arg9[%c16_43, %c0_44], %55 {strides = array<i32>} : memref<24x384xf32, #tpu.memory_space<vmem>>, vector<8x384xf32>,
    %c1 = arith.constant 1 : index
    %c0_45 = arith.constant 0 : index
    %c0_46 = arith.constant 0 : index
    %57 = vector.load %arg5[%c1, %c0_45, %c0_46] : memref<3x8x24xf32, #tpu.memory_space<vmem>>, vector<1x8x24xf32>
    %58 = vector.shape_cast %57 : vector<1x8x24xf32> to vector<8x24xf32>
    %c0_47 = arith.constant 0 : index
    %c0_48 = arith.constant 0 : index
    %59 = vector.load %arg9[%c0_47, %c0_48] : memref<24x384xf32, #tpu.memory_space<vmem>>, vector<24x384xf32>
    %cst_49 = arith.constant dense<0.000000e+00> : vector<8x384xf32>
    %60 = tpu.matmul %58, %59, %cst_49 {dimension_numbers = #tpu.dot_dimension_numbers<[1], [0], [0], [1], [0, 0, 1, 1], [], []>} : vector<8x24xf32>, vector<24x384xf32>, vector<8x384xf32> -> vector<8x384xf32>
    %cst_50 = arith.constant 0.000000e+00 : f32
    %61 = vector.broadcast %cst_50 : f32 to vector<8x384xf32>
    %62 = arith.maximumf %60, %61 : vector<8x384xf32>
    %c8_51 = arith.constant 8 : index
    %c0_52 = arith.constant 0 : index
    %63 = vector.load %arg6[%c8_51, %c0_52] : memref<24x1xf32, #tpu.memory_space<vmem>>, vector<8x1xf32>
    %64 = vector.broadcast %63 : vector<8x1xf32> to vector<8x384xf32>
    %65 = arith.mulf %62, %64 : vector<8x384xf32>
    %c8_53 = arith.constant 8 : index
    %c0_54 = arith.constant 0 : index
    %66 = vector.load %arg7[%c8_53, %c0_54] : memref<24x1xf32, #tpu.memory_space<vmem>>, vector<8x1xf32>
    %67 = vector.broadcast %66 : vector<8x1xf32> to vector<8x384xf32>
    %68 = arith.addf %65, %67 : vector<8x384xf32>
    %69 = vector.extract_strided_slice %68 {offsets = [0, 128], sizes = [8, 128], strides = [1, 1]} : vector<8x384xf32> to vector<8x128xf32>
    %c0_55 = arith.constant 0 : index
    %c8_56 = arith.constant 8 : index
    %c0_57 = arith.constant 0 : index
    %70 = vector.load %arg8[%c0_55, %c8_56, %c0_57] : memref<1x32x128xf32, #tpu.memory_space<vmem>>, vector<1x8x128xf32>
    %71 = vector.shape_cast %70 : vector<1x8x128xf32> to vector<8x128xf32>
    %72 = vector.shape_cast %69 : vector<8x128xf32> to vector<1x8x128xf32>
    tpu.vector_store %arg8[%c0_55, %c8_56, %c0_57], %72 {strides = array<i32>} : memref<1x32x128xf32, #tpu.memory_space<vmem>>, vector<1x8x128xf32>,
    %c0_58 = arith.constant 0 : index
    %c16_59 = arith.constant 16 : index
    %c0_60 = arith.constant 0 : index
    %73 = vector.load %arg3[%c0_58, %c16_59, %c0_60] : memref<1x32x128xf32, #tpu.memory_space<vmem>>, vector<1x8x128xf32>
    %74 = vector.shape_cast %73 : vector<1x8x128xf32> to vector<8x128xf32>
    %c0_61 = arith.constant 0 : index
    %c16_62 = arith.constant 16 : index
    %c0_63 = arith.constant 0 : index
    %75 = vector.load %arg2[%c0_61, %c16_62, %c0_63] : memref<1x32x128xf32, #tpu.memory_space<vmem>>, vector<1x8x128xf32>
    %76 = vector.shape_cast %75 : vector<1x8x128xf32> to vector<8x128xf32>
    %c0_64 = arith.constant 0 : index
    %c16_65 = arith.constant 16 : index
    %c0_66 = arith.constant 0 : index
    %77 = vector.load %arg4[%c0_64, %c16_65, %c0_66] : memref<1x32x128xf32, #tpu.memory_space<vmem>>, vector<1x8x128xf32>
    %78 = vector.shape_cast %77 : vector<1x8x128xf32> to vector<8x128xf32>
    %79 = tpu.concatenate %74, %76, %78 in 1 : vector<8x128xf32>, vector<8x128xf32>, vector<8x128xf32> -> vector<8x384xf32>
    %80 = arith.addf %68, %79 : vector<8x384xf32>
    %cst_67 = arith.constant 0.000000e+00 : f32
    %81 = vector.broadcast %cst_67 : f32 to vector<8x384xf32>
    %82 = arith.select %11, %80, %81 : vector<8x384xi1>, vector<8x384xf32>
    %c1_i32_68 = arith.constant 1 : i32
    %83 = tpu.dynamic_rotate %82 by %c1_i32_68 dim 1 : vector<8x384xf32>, i32 -> vector<8x384xf32>
    %c0_69 = arith.constant 0 : index
    %c0_70 = arith.constant 0 : index
    %84 = vector.load %arg9[%c0_69, %c0_70] : memref<24x384xf32, #tpu.memory_space<vmem>>, vector<8x384xf32>
    tpu.vector_store %arg9[%c0_69, %c0_70], %83 {strides = array<i32>} : memref<24x384xf32, #tpu.memory_space<vmem>>, vector<8x384xf32>,
    %c8_71 = arith.constant 8 : index
    %c0_72 = arith.constant 0 : index
    %85 = vector.load %arg9[%c8_71, %c0_72] : memref<24x384xf32, #tpu.memory_space<vmem>>, vector<8x384xf32>
    tpu.vector_store %arg9[%c8_71, %c0_72], %82 {strides = array<i32>} : memref<24x384xf32, #tpu.memory_space<vmem>>, vector<8x384xf32>,
    %c383_i32_73 = arith.constant 383 : i32
    %86 = tpu.dynamic_rotate %82 by %c383_i32_73 dim 1 : vector<8x384xf32>, i32 -> vector<8x384xf32>
    %c16_74 = arith.constant 16 : index
    %c0_75 = arith.constant 0 : index
    %87 = vector.load %arg9[%c16_74, %c0_75] : memref<24x384xf32, #tpu.memory_space<vmem>>, vector<8x384xf32>
    tpu.vector_store %arg9[%c16_74, %c0_75], %86 {strides = array<i32>} : memref<24x384xf32, #tpu.memory_space<vmem>>, vector<8x384xf32>,
    %c2 = arith.constant 2 : index
    %c0_76 = arith.constant 0 : index
    %c0_77 = arith.constant 0 : index
    %88 = vector.load %arg5[%c2, %c0_76, %c0_77] : memref<3x8x24xf32, #tpu.memory_space<vmem>>, vector<1x8x24xf32>
    %89 = vector.shape_cast %88 : vector<1x8x24xf32> to vector<8x24xf32>
    %c0_78 = arith.constant 0 : index
    %c0_79 = arith.constant 0 : index
    %90 = vector.load %arg9[%c0_78, %c0_79] : memref<24x384xf32, #tpu.memory_space<vmem>>, vector<24x384xf32>
    %cst_80 = arith.constant dense<0.000000e+00> : vector<8x384xf32>
    %91 = tpu.matmul %89, %90, %cst_80 {dimension_numbers = #tpu.dot_dimension_numbers<[1], [0], [0], [1], [0, 0, 1, 1], [], []>} : vector<8x24xf32>, vector<24x384xf32>, vector<8x384xf32> -> vector<8x384xf32>
    %cst_81 = arith.constant 0.000000e+00 : f32
    %92 = vector.broadcast %cst_81 : f32 to vector<8x384xf32>
    %93 = arith.maximumf %91, %92 : vector<8x384xf32>
    %c16_82 = arith.constant 16 : index
    %c0_83 = arith.constant 0 : index
    %94 = vector.load %arg6[%c16_82, %c0_83] : memref<24x1xf32, #tpu.memory_space<vmem>>, vector<8x1xf32>
    %95 = vector.broadcast %94 : vector<8x1xf32> to vector<8x384xf32>
    %96 = arith.mulf %93, %95 : vector<8x384xf32>
    %c16_84 = arith.constant 16 : index
    %c0_85 = arith.constant 0 : index
    %97 = vector.load %arg7[%c16_84, %c0_85] : memref<24x1xf32, #tpu.memory_space<vmem>>, vector<8x1xf32>
    %98 = vector.broadcast %97 : vector<8x1xf32> to vector<8x384xf32>
    %99 = arith.addf %96, %98 : vector<8x384xf32>
    %100 = vector.extract_strided_slice %99 {offsets = [0, 128], sizes = [8, 128], strides = [1, 1]} : vector<8x384xf32> to vector<8x128xf32>
    %c0_86 = arith.constant 0 : index
    %c16_87 = arith.constant 16 : index
    %c0_88 = arith.constant 0 : index
    %101 = vector.load %arg8[%c0_86, %c16_87, %c0_88] : memref<1x32x128xf32, #tpu.memory_space<vmem>>, vector<1x8x128xf32>
    %102 = vector.shape_cast %101 : vector<1x8x128xf32> to vector<8x128xf32>
    %103 = vector.shape_cast %100 : vector<8x128xf32> to vector<1x8x128xf32>
    tpu.vector_store %arg8[%c0_86, %c16_87, %c0_88], %103 {strides = array<i32>} : memref<1x32x128xf32, #tpu.memory_space<vmem>>, vector<1x8x128xf32>,
    %c0_89 = arith.constant 0 : index
    %c24 = arith.constant 24 : index
    %c0_90 = arith.constant 0 : index
    %104 = vector.load %arg2[%c0_89, %c24, %c0_90] : memref<1x32x128xf32, #tpu.memory_space<vmem>>, vector<1x8x128xf32>
    %105 = vector.shape_cast %104 : vector<1x8x128xf32> to vector<8x128xf32>
    %c0_91 = arith.constant 0 : index
    %c24_92 = arith.constant 24 : index
    %c0_93 = arith.constant 0 : index
    %106 = vector.load %arg8[%c0_91, %c24_92, %c0_93] : memref<1x32x128xf32, #tpu.memory_space<vmem>>, vector<1x8x128xf32>
    %107 = vector.shape_cast %106 : vector<1x8x128xf32> to vector<8x128xf32>
    %108 = vector.shape_cast %105 : vector<8x128xf32> to vector<1x8x128xf32>
    tpu.vector_store %arg8[%c0_91, %c24_92, %c0_93], %108 {strides = array<i32>} : memref<1x32x128xf32, #tpu.memory_space<vmem>>, vector<1x8x128xf32>,
    return
  }
  func.func @transform_0(%arg0: i32, %arg1: i32) -> (i32, i32, i32) {
    %c0_i32 = arith.constant 0 : i32
    %c0_i32_0 = arith.constant 0 : i32
    return %arg0, %c0_i32, %arg1 : i32, i32, i32
  }
  func.func @transform_1(%arg0: i32, %arg1: i32) -> (i32, i32, i32) {
    %c1_i32 = arith.constant 1 : i32
    %0 = arith.muli %arg1, %c1_i32 : i32
    %c1_i32_0 = arith.constant 1 : i32
    %1 = arith.subi %0, %c1_i32_0 : i32
    %c0_i32 = arith.constant 0 : i32
    %2 = arith.maxsi %1, %c0_i32 : i32
    %c0_i32_1 = arith.constant 0 : i32
    %c0_i32_2 = arith.constant 0 : i32
    return %arg0, %c0_i32_1, %2 : i32, i32, i32
  }
  func.func @transform_2(%arg0: i32, %arg1: i32) -> (i32, i32, i32) {
    %c1_i32 = arith.constant 1 : i32
    %0 = arith.addi %arg1, %c1_i32 : i32
    %c1_i32_0 = arith.constant 1 : i32
    %1 = arith.muli %0, %c1_i32_0 : i32
    %c2_i32 = arith.constant 2 : i32
    %2 = arith.minsi %1, %c2_i32 : i32
    %c0_i32 = arith.constant 0 : i32
    %c0_i32_1 = arith.constant 0 : i32
    return %arg0, %c0_i32, %2 : i32, i32, i32
  }
  func.func @transform_3(%arg0: i32, %arg1: i32) -> (i32, i32, i32) {
    %c0_i32 = arith.constant 0 : i32
    %c0_i32_0 = arith.constant 0 : i32
    %c0_i32_1 = arith.constant 0 : i32
    %c0_i32_2 = arith.constant 0 : i32
    return %c0_i32, %c0_i32_0, %c0_i32_1 : i32, i32, i32
  }
  func.func @transform_4(%arg0: i32, %arg1: i32) -> (i32, i32) {
    %c0_i32 = arith.constant 0 : i32
    %c0_i32_0 = arith.constant 0 : i32
    %c0_i32_1 = arith.constant 0 : i32
    return %c0_i32, %c0_i32_0 : i32, i32
  }
  func.func @transform_5(%arg0: i32, %arg1: i32) -> (i32, i32) {
    %c0_i32 = arith.constant 0 : i32
    %c0_i32_0 = arith.constant 0 : i32
    %c0_i32_1 = arith.constant 0 : i32
    return %c0_i32, %c0_i32_0 : i32, i32
  }
  func.func @transform_6(%arg0: i32, %arg1: i32) -> (i32, i32, i32) {
    %c0_i32 = arith.constant 0 : i32
    %c0_i32_0 = arith.constant 0 : i32
    return %arg0, %c0_i32, %arg1 : i32, i32, i32
  }
}

</mosaic_0001>

<llo_original>
// kernel: tpu_custom_call.1
$region0: #{tpu_custom_call.1}
  #allocation0 [shape = 'u32[]', space=smem, size = 0x4, offset = 0x4, fixed_abs, tag = 'smem constant byte address 0x4 - core index']
  #allocation1 [shape = 'u32[72,128]{1,0:T(1,128)}', space=vmem, size = 0x9000, scoped, tag = 'internal scratch']
  #allocation2 [shape = 'f32[24,384]{1,0:T(8,128)}', space=vmem, size = 0x9000, scoped, tag = 'scratch operand']
  %s0 = inlined_call_operand.hbm [shape: f32[2,32,320], index: 0, kind: input, shape index: {}]
  %s1 = inlined_call_operand.hbm [shape: f32[2,32,320], index: 1, kind: input, shape index: {}]
  %s2 = inlined_call_operand.hbm [shape: f32[2,32,320], index: 2, kind: input, shape index: {}]
  %s3 = inlined_call_operand.vmem [shape: f32[3,8,24], index: 3, kind: input, shape index: {}]
  %s4 = inlined_call_operand.vmem [shape: f32[24,1], index: 4, kind: input, shape index: {}]
  %s5 = inlined_call_operand.vmem [shape: f32[24,1], index: 5, kind: input, shape index: {}]
  %s6 = inlined_call_operand.hbm [shape: f32[2,32,320], index: 6, kind: output, shape index: {}]
  %s7 = sld [smem:[#allocation0]]
  $region69: #{tpu_custom_call.1} parent=0
    _
  %s9 = ssub.s32 1, %s7
  %s10 = scalar_select 0, %s9, %s7
  $region1: #{tpu_custom_call.1} parent=0
    #allocation3 [shape = 'u8[32768]{0}', space=vmem, size = 0x8000, scoped, tag = 'input window, operand 0']
    #allocation4 [shape = 's32[2]{0}', space=sflag, size = 0x8, scoped, tag = 'scoped memory for tpu_custom_call.1']
    #allocation5 [shape = 's32[2]{0}', space=sflag, size = 0x8, scoped, tag = 'scoped memory for tpu_custom_call.1']
    #allocation6 [shape = 'u8[32768]{0}', space=vmem, size = 0x8000, scoped, tag = 'input window, operand 1']
    #allocation7 [shape = 's32[2]{0}', space=sflag, size = 0x8, scoped, tag = 'scoped memory for tpu_custom_call.1']
    #allocation8 [shape = 'u8[32768]{0}', space=vmem, size = 0x8000, scoped, tag = 'input window, operand 2']
    #allocation9 [shape = 'u8[32768]{0}', space=vmem, size = 0x8000, scoped, tag = 'output window, operand 0']
    %11 = vsyncpa [#allocation4], 0
    %s12 = scalar_lea.sflag [#allocation4], 1
    %13 = vsyncpa %s12, 0
    %14 = vsyncpa [#allocation7], 0
    %s15 = scalar_lea.sflag [#allocation7], 1
    %16 = vsyncpa %s15, 0
    %17 = vsyncpa [#allocation5], 0
    %s18 = scalar_lea.sflag [#allocation5], 1
    %19 = vsyncpa %s18, 0
    loop: start=0, step=1, limit=8
    $region2: #{tpu_custom_call.1} parent=1 // loop_pre_header
      _
    $region3: #{tpu_custom_call.1} parent=1 // loop_header
      %s21 = sphi 0, %s25
      %p22 = scmp.ge.s32.totalorder %s21, 8
      %s28 = sphi 0, %s40
      %s29 = sphi 0, %s36
      %s30 = sphi 0, %s28
      %s31 = sphi 0, %s29
      %s32 = sphi 0, %s30
      %s33 = sphi 0, %s31
      %s45 = sphi 0, %s47
      %s48 = sphi 0, %s45
      %s49 = sphi 0, %s48
      %s65 = sphi 0, %s49
      %s79 = sphi 0, %s81
      %s82 = sphi 0, %s79
      %s83 = sphi 0, %s82
      %s99 = sphi 0, %s83
      %s113 = sphi 0, %s115
      %s116 = sphi 0, %s113
      %s117 = sphi 0, %s116
      %s133 = sphi 0, %s117
      %s137 = sphi 0, %s137
      %s139 = sphi 0, %s137
      %s140 = sphi 0, %s139
      %s154 = sphi 0, %s140
      %s158 = sphi 0, %s158
      %s160 = sphi 0, %s158
      %s161 = sphi 0, %s160
      %s175 = sphi 0, %s161
      %s179 = sphi 0, %s179
      %s181 = sphi 0, %s179
      %s182 = sphi 0, %s181
      %s196 = sphi 0, %s182
      %s204 = sphi 0, %s206
      %s207 = sphi 0, %s204
      %s208 = sphi 0, %s207
      %s224 = sphi 0, %s208
    $region4: #{tpu_custom_call.1} parent=1 // loop_header_branch
      %24 = sbr.rel (%p22) target = $region8
    $region5: #{tpu_custom_call.1} parent=1 // loop_body
      %s26 = ssub.s32 %s21, 1
      %s27 = ssub.s32 %s21, 2
      %s34 = sadd.s32 1, %s29
      %p35 = scmp.ge.s32.totalorder %s34, 3
      %s36 = scalar_select %p35, 0, %s34
      %s37 = sadd.s32 1, %s28
      %s38 = scalar_select %p35, %s37, %s28
      %p39 = scmp.ge.s32.totalorder %s38, 2
      %s40 = scalar_select %p39, 0, %s38
      %s41 = ssub.s32 %s28, %s40
      %s42 = ssub.s32 %s29, %s36
      %s43 = sor.u32 %s41, %s42
      %p44 = scmp.eq.s32.totalorder %s43, 0
      %s46 = sadd.s32 %s45, 1
      %s47 = scalar_select %p44, %s45, %s46
      %p50 = pneg %p44
      %p51 = scmp.eq.s32.totalorder %s21, 5
      %p52 = por %p50, %p51
      %p53 = scmp.ne.s32.totalorder %s45, %s48
      %p54 = scmp.eq.s32.totalorder %s21, 0
      %p55 = por %p53, %p54
      %p56 = scmp.ne.s32.totalorder %s45, %s48
      %p57 = scmp.eq.s32.totalorder %s26, 5
      %p58 = por %p56, %p57
      %p59 = scmp.ne.s32.totalorder %s48, %s49
      %p60 = scmp.eq.s32.totalorder %s26, 0
      %p61 = por %p59, %p60
      %p62 = scmp.ne.s32.totalorder %s48, %s49
      %p63 = scmp.eq.s32.totalorder %s27, 5
      %p64 = por %p62, %p63
      %p66 = scmp.ne.s32.totalorder %s49, %s65
      %p67 = scmp.eq.s32.totalorder %s27, 0
      %p68 = por %p66, %p67
      %s69 = ssub.s32 %s29, 1
      %p70 = scmp.gt.s32.totalorder %s69, 0
      %s71 = scalar_select %p70, %s69, 0
      %s72 = ssub.s32 %s36, 1
      %p73 = scmp.gt.s32.totalorder %s72, 0
      %s74 = scalar_select %p73, %s72, 0
      %s75 = ssub.s32 %s28, %s40
      %s76 = ssub.s32 %s71, %s74
      %s77 = sor.u32 %s75, %s76
      %p78 = scmp.eq.s32.totalorder %s77, 0
      %s80 = sadd.s32 %s79, 1
      %s81 = scalar_select %p78, %s79, %s80
      %p84 = pneg %p78
      %p85 = scmp.eq.s32.totalorder %s21, 5
      %p86 = por %p84, %p85
      %p87 = scmp.ne.s32.totalorder %s79, %s82
      %p88 = scmp.eq.s32.totalorder %s21, 0
      %p89 = por %p87, %p88
      %p90 = scmp.ne.s32.totalorder %s79, %s82
      %p91 = scmp.eq.s32.totalorder %s26, 5
      %p92 = por %p90, %p91
      %p93 = scmp.ne.s32.totalorder %s82, %s83
      %p94 = scmp.eq.s32.totalorder %s26, 0
      %p95 = por %p93, %p94
      %p96 = scmp.ne.s32.totalorder %s82, %s83
      %p97 = scmp.eq.s32.totalorder %s27, 5
      %p98 = por %p96, %p97
      %p100 = scmp.ne.s32.totalorder %s83, %s99
      %p101 = scmp.eq.s32.totalorder %s27, 0
      %p102 = por %p100, %p101
      %s103 = sadd.s32 %s29, 1
      %p104 = scmp.lt.s32.totalorder %s103, 2
      %s105 = scalar_select %p104, %s103, 2
      %s106 = sadd.s32 %s36, 1
      %p107 = scmp.lt.s32.totalorder %s106, 2
      %s108 = scalar_select %p107, %s106, 2
      %s109 = ssub.s32 %s28, %s40
      %s110 = ssub.s32 %s105, %s108
      %s111 = sor.u32 %s109, %s110
      %p112 = scmp.eq.s32.totalorder %s111, 0
      %s114 = sadd.s32 %s113, 1
      %s115 = scalar_select %p112, %s113, %s114
      %p118 = pneg %p112
      %p119 = scmp.eq.s32.totalorder %s21, 5
      %p120 = por %p118, %p119
      %p121 = scmp.ne.s32.totalorder %s113, %s116
      %p122 = scmp.eq.s32.totalorder %s21, 0
      %p123 = por %p121, %p122
      %p124 = scmp.ne.s32.totalorder %s113, %s116
      %p125 = scmp.eq.s32.totalorder %s26, 5
      %p126 = por %p124, %p125
      %p127 = scmp.ne.s32.totalorder %s116, %s117
      %p128 = scmp.eq.s32.totalorder %s26, 0
      %p129 = por %p127, %p128
      %p130 = scmp.ne.s32.totalorder %s116, %s117
      %p131 = scmp.eq.s32.totalorder %s27, 5
      %p132 = por %p130, %p131
      %p134 = scmp.ne.s32.totalorder %s117, %s133
      %p135 = scmp.eq.s32.totalorder %s27, 0
      %p136 = por %p134, %p135
      %s138 = sadd.s32 %s137, 1
      %p141 = scmp.eq.s32.totalorder %s21, 5
      %p142 = scmp.ne.s32.totalorder %s137, %s139
      %p143 = scmp.eq.s32.totalorder %s21, 0
      %p144 = por %p142, %p143
      %p145 = scmp.ne.s32.totalorder %s137, %s139
      %p146 = scmp.eq.s32.totalorder %s26, 5
      %p147 = por %p145, %p146
      %p148 = scmp.ne.s32.totalorder %s139, %s140
      %p149 = scmp.eq.s32.totalorder %s26, 0
      %p150 = por %p148, %p149
      %p151 = scmp.ne.s32.totalorder %s139, %s140
      %p152 = scmp.eq.s32.totalorder %s27, 5
      %p153 = por %p151, %p152
      %p155 = scmp.ne.s32.totalorder %s140, %s154
      %p156 = scmp.eq.s32.totalorder %s27, 0
      %p157 = por %p155, %p156
      %s159 = sadd.s32 %s158, 1
      %p162 = scmp.eq.s32.totalorder %s21, 5
      %p163 = scmp.ne.s32.totalorder %s158, %s160
      %p164 = scmp.eq.s32.totalorder %s21, 0
      %p165 = por %p163, %p164
      %p166 = scmp.ne.s32.totalorder %s158, %s160
      %p167 = scmp.eq.s32.totalorder %s26, 5
      %p168 = por %p166, %p167
      %p169 = scmp.ne.s32.totalorder %s160, %s161
      %p170 = scmp.eq.s32.totalorder %s26, 0
      %p171 = por %p169, %p170
      %p172 = scmp.ne.s32.totalorder %s160, %s161
      %p173 = scmp.eq.s32.totalorder %s27, 5
      %p174 = por %p172, %p173
      %p176 = scmp.ne.s32.totalorder %s161, %s175
      %p177 = scmp.eq.s32.totalorder %s27, 0
      %p178 = por %p176, %p177
      %s180 = sadd.s32 %s179, 1
      %p183 = scmp.eq.s32.totalorder %s21, 5
      %p184 = scmp.ne.s32.totalorder %s179, %s181
      %p185 = scmp.eq.s32.totalorder %s21, 0
      %p186 = por %p184, %p185
      %p187 = scmp.ne.s32.totalorder %s179, %s181
      %p188 = scmp.eq.s32.totalorder %s26, 5
      %p189 = por %p187, %p188
      %p190 = scmp.ne.s32.totalorder %s181, %s182
      %p191 = scmp.eq.s32.totalorder %s26, 0
      %p192 = por %p190, %p191
      %p193 = scmp.ne.s32.totalorder %s181, %s182
      %p194 = scmp.eq.s32.totalorder %s27, 5
      %p195 = por %p193, %p194
      %p197 = scmp.ne.s32.totalorder %s182, %s196
      %p198 = scmp.eq.s32.totalorder %s27, 0
      %p199 = por %p197, %p198
      %s200 = ssub.s32 %s28, %s40
      %s201 = ssub.s32 %s29, %s36
      %s202 = sor.u32 %s200, %s201
      %p203 = scmp.eq.s32.totalorder %s202, 0
      %s205 = sadd.s32 %s204, 1
      %s206 = scalar_select %p203, %s204, %s205
      %p209 = pneg %p203
      %p210 = scmp.eq.s32.totalorder %s21, 5
      %p211 = por %p209, %p210
      %p212 = scmp.ne.s32.totalorder %s204, %s207
      %p213 = scmp.eq.s32.totalorder %s21, 0
      %p214 = por %p212, %p213
      %p215 = scmp.ne.s32.totalorder %s204, %s207
      %p216 = scmp.eq.s32.totalorder %s26, 5
      %p217 = por %p215, %p216
      %p218 = scmp.ne.s32.totalorder %s207, %s208
      %p219 = scmp.eq.s32.totalorder %s26, 0
      %p220 = por %p218, %p219
      %p221 = scmp.ne.s32.totalorder %s207, %s208
      %p222 = scmp.eq.s32.totalorder %s27, 5
      %p223 = por %p221, %p222
      %p225 = scmp.ne.s32.totalorder %s208, %s224
      %p226 = scmp.eq.s32.totalorder %s27, 0
      %p227 = por %p225, %p226
      %p228 = scmp.le.s32.totalorder 1, %s21
      %p229 = scmp.lt.s32.totalorder %s21, 7
      %p230 = pnand %p228, %p229
      %p231 = pneg %p230
      // Predicated region
      $region9: #{tpu_custom_call.1} parent=5 // pred_check
        _
      $region10: #{tpu_custom_call.1} parent=5 // pred_check_branch
        %233 = sbr.rel (%p230) target = $region12
      $region11: #{tpu_custom_call.1} parent=5 // pred_region
        %s234 = ssub.s32 %s21, 1
        // Predicated region
        $region13: #{tpu_custom_call.1} parent=11 // pred_check
          %p235 = pneg %p150
        $region14: #{tpu_custom_call.1} parent=11 // pred_check_branch
          %237 = sbr.rel (%p235) target = $region16
        $region15: #{tpu_custom_call.1} parent=11 // pred_region
          _
        $region16: #{tpu_custom_call.1} parent=11 // pred_fallthru
          _
        // Predicated region
        $region17: #{tpu_custom_call.1} parent=11 // pred_check
          %p238 = pneg %p171
        $region18: #{tpu_custom_call.1} parent=11 // pred_check_branch
          %240 = sbr.rel (%p238) target = $region20
        $region19: #{tpu_custom_call.1} parent=11 // pred_region
          _
        $region20: #{tpu_custom_call.1} parent=11 // pred_fallthru
          _
        // Predicated region
        $region21: #{tpu_custom_call.1} parent=11 // pred_check
          %p241 = pneg %p192
        $region22: #{tpu_custom_call.1} parent=11 // pred_check_branch
          %243 = sbr.rel (%p241) target = $region24
        $region23: #{tpu_custom_call.1} parent=11 // pred_region
          _
        $region24: #{tpu_custom_call.1} parent=11 // pred_fallthru
          _
      $region12: #{tpu_custom_call.1} parent=5 // pred_fallthru
        _
      %p244 = scmp.lt.s32.totalorder %s21, 6
      // Predicated region
      $region25: #{tpu_custom_call.1} parent=5 // pred_check
        %p245 = pneg %p244
      $region26: #{tpu_custom_call.1} parent=5 // pred_check_branch
        %247 = sbr.rel (%p245) target = $region28
      $region27: #{tpu_custom_call.1} parent=5 // pred_region
        // Predicated region
        $region29: #{tpu_custom_call.1} parent=27 // pred_check
          %p248 = pneg %p55
        $region30: #{tpu_custom_call.1} parent=27 // pred_check_branch
          %250 = sbr.rel (%p248) target = $region32
        $region31: #{tpu_custom_call.1} parent=27 // pred_region
          %s251 = sand.u32 %s45, 1
          %s252 = scalar_lea.sflag [#allocation4], %s251
          %s253 = sand.u32 %s45, 1
          %s254 = smul.addr %s253, 32
          %s255 = scalar_lea.vmem [#allocation3], %s254
          %257 = vsyncadd %s252, 0
          %s258 = smul.addr %s28, 12
          %s259 = sadd.s32 %s29, %s258
          %s260 = smul.addr %s259, 8
          %s261 = scalar_lea.hbm %s0, %s260
          %s262 = sshll.u32 %s261, 4
          %s263 = int_to_ptr.hbm [resolvable:$true] %s262
          %s264 = sshll.u32 %s255, 4
          %s265 = int_to_ptr.vmem [resolvable:$true] %s264
          %270 = dma.hbm_to_vmem [thread:$0]  %s263, 512, %s265, %s252, 384, 128, 8
        $region32: #{tpu_custom_call.1} parent=27 // pred_fallthru
          _
        // Predicated region
        $region33: #{tpu_custom_call.1} parent=27 // pred_check
          %p271 = pneg %p89
        $region34: #{tpu_custom_call.1} parent=27 // pred_check_branch
          %273 = sbr.rel (%p271) target = $region36
        $region35: #{tpu_custom_call.1} parent=27 // pred_region
          %s274 = sand.u32 %s21, 1
          %s275 = scalar_lea.sflag [#allocation7], %s274
          %s276 = sand.u32 %s79, 1
          %s277 = smul.addr %s276, 32
          %s278 = scalar_lea.vmem [#allocation6], %s277
          %s279 = ssub.s32 %s29, 1
          %p280 = scmp.gt.s32.totalorder %s279, 0
          %s281 = scalar_select %p280, %s279, 0
          %283 = vsyncadd %s275, 0
          %s284 = smul.addr %s28, 12
          %s285 = sadd.s32 %s281, %s284
          %s286 = smul.addr %s285, 8
          %s287 = scalar_lea.hbm %s1, %s286
          %s288 = sshll.u32 %s287, 4
          %s289 = int_to_ptr.hbm [resolvable:$true] %s288
          %s290 = sshll.u32 %s278, 4
          %s291 = int_to_ptr.vmem [resolvable:$true] %s290
          %296 = dma.hbm_to_vmem [thread:$0]  %s289, 512, %s291, %s275, 384, 128, 8
        $region36: #{tpu_custom_call.1} parent=27 // pred_fallthru
          _
        // Predicated region
        $region37: #{tpu_custom_call.1} parent=27 // pred_check
          %p297 = pneg %p123
        $region38: #{tpu_custom_call.1} parent=27 // pred_check_branch
          %299 = sbr.rel (%p297) target = $region40
        $region39: #{tpu_custom_call.1} parent=27 // pred_region
          %s300 = sand.u32 %s21, 1
          %s301 = scalar_lea.sflag [#allocation7], %s300
          %s302 = sand.u32 %s113, 1
          %s303 = smul.addr %s302, 32
          %s304 = scalar_lea.vmem [#allocation8], %s303
          %s305 = sadd.s32 %s29, 1
          %p306 = scmp.lt.s32.totalorder %s305, 2
          %s307 = scalar_select %p306, %s305, 2
          %309 = vsyncadd %s301, 0
          %s310 = smul.addr %s28, 12
          %s311 = sadd.s32 %s307, %s310
          %s312 = smul.addr %s311, 8
          %s313 = scalar_lea.hbm %s2, %s312
          %s314 = sshll.u32 %s313, 4
          %s315 = int_to_ptr.hbm [resolvable:$true] %s314
          %s316 = sshll.u32 %s304, 4
          %s317 = int_to_ptr.vmem [resolvable:$true] %s316
          %322 = dma.hbm_to_vmem [thread:$0]  %s315, 512, %s317, %s301, 384, 128, 8
        $region40: #{tpu_custom_call.1} parent=27 // pred_fallthru
          _
      $region28: #{tpu_custom_call.1} parent=5 // pred_fallthru
        _
      %p323 = scmp.le.s32.totalorder 1, %s21
      %p324 = scmp.lt.s32.totalorder %s21, 7
      %p325 = pnand %p323, %p324
      %p326 = pneg %p325
      // Predicated region
      $region41: #{tpu_custom_call.1} parent=5 // pred_check
        _
      $region42: #{tpu_custom_call.1} parent=5 // pred_check_branch
        %328 = sbr.rel (%p325) target = $region44
      $region43: #{tpu_custom_call.1} parent=5 // pred_region
        %s329 = ssub.s32 %s21, 1
        %s330 = sand.u32 %s48, 1
        %s331 = scalar_lea.sflag [#allocation4], %s330
        %s332 = sand.u32 %s48, 1
        %s333 = smul.addr %s332, 32
        %s334 = scalar_lea.vmem [#allocation3], %s333
        // Predicated region
        $region45: #{tpu_custom_call.1} parent=43 // pred_check
          %p335 = pneg %p61
        $region46: #{tpu_custom_call.1} parent=43 // pred_check_branch
          %337 = sbr.rel (%p335) target = $region48
        $region47: #{tpu_custom_call.1} parent=43 // pred_region
          %339 = dma.done %s331, 512
        $region48: #{tpu_custom_call.1} parent=43 // pred_fallthru
          _
        %s340 = sand.u32 %s26, 1
        %s341 = scalar_lea.sflag [#allocation7], %s340
        %s342 = sand.u32 %s82, 1
        %s343 = smul.addr %s342, 32
        %s344 = scalar_lea.vmem [#allocation6], %s343
        // Predicated region
        $region49: #{tpu_custom_call.1} parent=43 // pred_check
          %p345 = pneg %p95
        $region50: #{tpu_custom_call.1} parent=43 // pred_check_branch
          %347 = sbr.rel (%p345) target = $region52
        $region51: #{tpu_custom_call.1} parent=43 // pred_region
          %349 = dma.done %s341, 512
        $region52: #{tpu_custom_call.1} parent=43 // pred_fallthru
          _
        %s350 = sand.u32 %s26, 1
        %s351 = scalar_lea.sflag [#allocation7], %s350
        %s352 = sand.u32 %s116, 1
        %s353 = smul.addr %s352, 32
        %s354 = scalar_lea.vmem [#allocation8], %s353
        // Predicated region
        $region53: #{tpu_custom_call.1} parent=43 // pred_check
          %p355 = pneg %p129
        $region54: #{tpu_custom_call.1} parent=43 // pred_check_branch
          %357 = sbr.rel (%p355) target = $region56
        $region55: #{tpu_custom_call.1} parent=43 // pred_region
          %359 = dma.done %s351, 512
        $region56: #{tpu_custom_call.1} parent=43 // pred_fallthru
          _
        %s360 = sand.u32 %s48, 1
        %s361 = scalar_lea.sflag [#allocation4], %s360
        %s362 = sand.u32 %s48, 1
        %s363 = smul.addr %s362, 32
        %s364 = scalar_lea.vmem [#allocation3], %s363
        %p365 = pneg %p61
        %p366 = pneg %p58
        %s367 = sand.u32 %s26, 1
        %s368 = scalar_lea.sflag [#allocation7], %s367
        %s369 = sand.u32 %s82, 1
        %s370 = smul.addr %s369, 32
        %s371 = scalar_lea.vmem [#allocation6], %s370
        %p372 = pneg %p95
        %p373 = pneg %p92
        %s374 = sand.u32 %s26, 1
        %s375 = scalar_lea.sflag [#allocation7], %s374
        %s376 = sand.u32 %s116, 1
        %s377 = smul.addr %s376, 32
        %s378 = scalar_lea.vmem [#allocation8], %s377
        %p379 = pneg %p129
        %p380 = pneg %p126
        %p381 = pneg %p150
        %p382 = pneg %p147
        %p383 = pneg %p171
        %p384 = pneg %p168
        %p385 = pneg %p192
        %p386 = pneg %p189
        %p387 = pneg %p220
        %p388 = pneg %p217
        %s389 = sand.u32 %s207, 1
        %s390 = scalar_lea.sflag [#allocation5], %s389
        %s391 = sand.u32 %s207, 1
        %s392 = smul.addr %s391, 32
        %s393 = scalar_lea.vmem [#allocation9], %s392
        %s394 = ssub.s32 %s31, 1
        %p395 = scmp.gt.s32.totalorder %s394, 0
        %s396 = scalar_select %p395, %s394, 0
        %s397 = sadd.s32 %s31, 1
        %p398 = scmp.lt.s32.totalorder %s397, 2
        %s399 = scalar_select %p398, %s397, 2
        %v400 = vlaneseq
        %v401 = vand.u32 %v400, 127
        %v402 = vadd.s32 %v401, 128
        %v403 = vadd.s32 %v401, 256
        %s404 = smul.u32 %s31, 128
        %s405 = ssub.s32 %s404, 128
        %v406 = vstv %s405
        %v407 = vadd.s32 %v401, %v406
        %v408 = vadd.s32 %v402, %v406
        %v409 = vadd.s32 %v403, %v406
        %vm410 = vcmp.ge.s32.totalorder %v407, 0
        %vm411 = vcmp.ge.s32.totalorder %v408, 0
        %vm412 = vcmp.ge.s32.totalorder %v409, 0
        %vm413 = vcmp.lt.s32.totalorder %v407, 320
        %vm414 = vcmp.lt.s32.totalorder %v408, 320
        %vm415 = vcmp.lt.s32.totalorder %v409, 320
        %vm416 = vmand %vm410, %vm413
        %vm417 = vmand %vm411, %vm414
        %vm418 = vmand %vm412, %vm415
        %v419 = vsel %vm416, 1, 0
        %v420 = vsel %vm417, 1, 0
        %v421 = vsel %vm418, 1, 0
        %vm422 = vcmp.eq.s32.totalorder %v419, 1
        %vm423 = vcmp.eq.s32.totalorder %v420, 1
        %vm424 = vcmp.eq.s32.totalorder %v421, 1
        %v425 = vld [vmem:[%s344] sm:$0xff]
        %v426 = vld [vmem:[%s334] sm:$0xff]
        %v427 = vld [vmem:[%s354] sm:$0xff]
        %v428 = vsel %vm422, %v425, 0.0
        %v429 = vsel %vm423, %v426, 0.0
        %v430 = vsel %vm424, %v427, 0.0
        %431 = vrot.lane.b32.xlu0 %v428, 1
        %v432 = vpop.permute.xlu0 %431
        %433 = vrot.lane.b32.xlu0 %v429, 1
        %v434 = vpop.permute.xlu0 %433
        %435 = vrot.lane.b32.xlu0 %v430, 1
        %v436 = vpop.permute.xlu0 %435
        %vm437 = vcmp.lt.s32.totalorder %v401, 1
        %v438 = vsel %vm437, %v434, %v436
        %v439 = vsel %vm437, %v432, %v434
        %v440 = vsel %vm437, %v436, %v432
        %441 = vst [vmem:[#allocation2] sm:$0xff] %v440
        %442 = vst [vmem:[#allocation2 + $0x8] sm:$0xff] %v439
        %443 = vst [vmem:[#allocation2 + $0x10] sm:$0xff] %v438
        %444 = vst [vmem:[#allocation2 + $0x18] sm:$0xff] %v428
        %445 = vst [vmem:[#allocation2 + $0x20] sm:$0xff] %v429
        %446 = vst [vmem:[#allocation2 + $0x28] sm:$0xff] %v430
        %447 = vrot.lane.b32.xlu0 %v428, 127
        %v448 = vpop.permute.xlu0 %447
        %449 = vrot.lane.b32.xlu0 %v429, 127
        %v450 = vpop.permute.xlu0 %449
        %451 = vrot.lane.b32.xlu0 %v430, 127
        %v452 = vpop.permute.xlu0 %451
        %vm453 = vcmp.lt.s32.totalorder %v401, 127
        %v454 = vsel %vm453, %v450, %v452
        %v455 = vsel %vm453, %v448, %v450
        %v456 = vsel %vm453, %v452, %v448
        %457 = vst [vmem:[#allocation2 + $0x30] sm:$0xff] %v455
        %458 = vst [vmem:[#allocation2 + $0x38] sm:$0xff] %v454
        %459 = vst [vmem:[#allocation2 + $0x40] sm:$0xff] %v456
        %v460 = vld [vmem:[%s3] sm:$0xff]
        %v461 = vld [vmem:[#allocation2] sm:$0xff]
        %v462 = vld [vmem:[#allocation2 + $0x8] sm:$0xff]
        %v463 = vld [vmem:[#allocation2 + $0x10] sm:$0xff]
        %v464 = vld [vmem:[#allocation2 + $0x18] sm:$0xff]
        %v465 = vld [vmem:[#allocation2 + $0x20] sm:$0xff]
        %v466 = vld [vmem:[#allocation2 + $0x28] sm:$0xff]
        %v467 = vld [vmem:[#allocation2 + $0x30] sm:$0xff]
        %v468 = vld [vmem:[#allocation2 + $0x38] sm:$0xff]
        %v469 = vld [vmem:[#allocation2 + $0x40] sm:$0xff]
        %vm470 = vcmask 195584
        %v472 = vsel %vm470, %v460, 0
        %474 = vmatpush.msra.mxu0 0.0
        %475 = vmatpush.msra.mxu0 0.0
        %476 = vmatpush.msra.mxu0 0.0
        %477 = vmatpush.msra.mxu0 0.0
        %478 = vmatpush.msra.mxu0 0.0
        %479 = vmatpush.msra.mxu0 0.0
        %480 = vmatpush.msra.mxu0 0.0
        %481 = vmatpush.msra.mxu0 0.0
        %482 = vmatpush.msra.mxu0 0.0
        %483 = vmatpush.msra.mxu0 0.0
        %484 = vmatpush.msra.mxu0 0.0
        %485 = vmatpush.msra.mxu0 0.0
        %486 = vmatpush.msra.mxu0 0.0
        %487 = vmatpush.msra.mxu0 %v467
        %488 = vmatpush.msra.mxu0 %v464
        %489 = vmatpush.msra.mxu0 %v461
        %490 = vmatmul.f32.gmra.mxu0 %v472
        %v491 = vpop.f32.mrf.mxu0
        %v492 = vadd.f32 0.0, %v491
        %493 = vdwg.mxu0
        %494 = vmatpush.msra.mxu0 0.0
        %495 = vmatpush.msra.mxu0 0.0
        %496 = vmatpush.msra.mxu0 0.0
        %497 = vmatpush.msra.mxu0 0.0
        %498 = vmatpush.msra.mxu0 0.0
        %499 = vmatpush.msra.mxu0 0.0
        %500 = vmatpush.msra.mxu0 0.0
        %501 = vmatpush.msra.mxu0 0.0
        %502 = vmatpush.msra.mxu0 0.0
        %503 = vmatpush.msra.mxu0 0.0
        %504 = vmatpush.msra.mxu0 0.0
        %505 = vmatpush.msra.mxu0 0.0
        %506 = vmatpush.msra.mxu0 0.0
        %507 = vmatpush.msra.mxu0 %v468
        %508 = vmatpush.msra.mxu0 %v465
        %509 = vmatpush.msra.mxu0 %v462
        %510 = vmatmul.f32.gmra.mxu0 %v472
        %v511 = vpop.f32.mrf.mxu0
        %v512 = vadd.f32 0.0, %v511
        %513 = vdwg.mxu0
        %514 = vmatpush.msra.mxu0 0.0
        %515 = vmatpush.msra.mxu0 0.0
        %516 = vmatpush.msra.mxu0 0.0
        %517 = vmatpush.msra.mxu0 0.0
        %518 = vmatpush.msra.mxu0 0.0
        %519 = vmatpush.msra.mxu0 0.0
        %520 = vmatpush.msra.mxu0 0.0
        %521 = vmatpush.msra.mxu0 0.0
        %522 = vmatpush.msra.mxu0 0.0
        %523 = vmatpush.msra.mxu0 0.0
        %524 = vmatpush.msra.mxu0 0.0
        %525 = vmatpush.msra.mxu0 0.0
        %526 = vmatpush.msra.mxu0 0.0
        %527 = vmatpush.msra.mxu0 %v469
        %528 = vmatpush.msra.mxu0 %v466
        %529 = vmatpush.msra.mxu0 %v463
        %530 = vmatmul.f32.gmra.mxu0 %v472
        %v531 = vpop.f32.mrf.mxu0
        %v532 = vadd.f32 0.0, %v531
        %533 = vdwg.mxu0
        %v534 = vmax.f32 %v492, 0.0
        %v535 = vmax.f32 %v512, 0.0
        %v536 = vmax.f32 %v532, 0.0
        %v537 = vld [vmem:[%s4] sm:$0xff]
        %539 = vset.pattern.permute.xlu0 0
        %540 = vperm.xlu0 %539, %v537
        %v541 = vpop.permute.xlu0 %540
        %v543 = vmul.f32 %v534, %v541
        %v544 = vmul.f32 %v535, %v541
        %v545 = vmul.f32 %v536, %v541
        %v546 = vld [vmem:[%s5] sm:$0xff]
        %548 = vset.pattern.permute.xlu0 0
        %549 = vperm.xlu0 %548, %v546
        %v550 = vpop.permute.xlu0 %549
        %v552 = vadd.f32 %v543, %v550
        %v553 = vadd.f32 %v544, %v550
        %v554 = vadd.f32 %v545, %v550
        %555 = vst [vmem:[%s393] sm:$0xff] %v553
        %v556 = vld [vmem:[%s344 + $0x8] sm:$0xff]
        %v557 = vld [vmem:[%s334 + $0x8] sm:$0xff]
        %v558 = vld [vmem:[%s354 + $0x8] sm:$0xff]
        %v559 = vadd.f32 %v552, %v556
        %v560 = vadd.f32 %v553, %v557
        %v561 = vadd.f32 %v554, %v558
        %v562 = vsel %vm422, %v559, 0.0
        %v563 = vsel %vm423, %v560, 0.0
        %v564 = vsel %vm424, %v561, 0.0
        %565 = vrot.lane.b32.xlu0 %v562, 1
        %v566 = vpop.permute.xlu0 %565
        %567 = vrot.lane.b32.xlu0 %v563, 1
        %v568 = vpop.permute.xlu0 %567
        %569 = vrot.lane.b32.xlu0 %v564, 1
        %v570 = vpop.permute.xlu0 %569
        %v571 = vsel %vm437, %v568, %v570
        %v572 = vsel %vm437, %v566, %v568
        %v573 = vsel %vm437, %v570, %v566
        %574 = vst [vmem:[#allocation2] sm:$0xff] %v573
        %575 = vst [vmem:[#allocation2 + $0x8] sm:$0xff] %v572
        %576 = vst [vmem:[#allocation2 + $0x10] sm:$0xff] %v571
        %577 = vst [vmem:[#allocation2 + $0x18] sm:$0xff] %v562
        %578 = vst [vmem:[#allocation2 + $0x20] sm:$0xff] %v563
        %579 = vst [vmem:[#allocation2 + $0x28] sm:$0xff] %v564
        %580 = vrot.lane.b32.xlu0 %v562, 127
        %v581 = vpop.permute.xlu0 %580
        %582 = vrot.lane.b32.xlu0 %v563, 127
        %v583 = vpop.permute.xlu0 %582
        %584 = vrot.lane.b32.xlu0 %v564, 127
        %v585 = vpop.permute.xlu0 %584
        %v586 = vsel %vm453, %v583, %v585
        %v587 = vsel %vm453, %v581, %v583
        %v588 = vsel %vm453, %v585, %v581
        %589 = vst [vmem:[#allocation2 + $0x30] sm:$0xff] %v587
        %590 = vst [vmem:[#allocation2 + $0x38] sm:$0xff] %v586
        %591 = vst [vmem:[#allocation2 + $0x40] sm:$0xff] %v588
        %s592 = scalar_lea.vmem %s3, 8
        %v593 = vld [vmem:[%s592] sm:$0xff]
        %v594 = vld [vmem:[#allocation2] sm:$0xff]
        %v595 = vld [vmem:[#allocation2 + $0x8] sm:$0xff]
        %v596 = vld [vmem:[#allocation2 + $0x10] sm:$0xff]
        %v597 = vld [vmem:[#allocation2 + $0x18] sm:$0xff]
        %v598 = vld [vmem:[#allocation2 + $0x20] sm:$0xff]
        %v599 = vld [vmem:[#allocation2 + $0x28] sm:$0xff]
        %v600 = vld [vmem:[#allocation2 + $0x30] sm:$0xff]
        %v601 = vld [vmem:[#allocation2 + $0x38] sm:$0xff]
        %v602 = vld [vmem:[#allocation2 + $0x40] sm:$0xff]
        %v604 = vsel %vm470, %v593, 0
        %606 = vmatpush.msra.mxu0 0.0
        %607 = vmatpush.msra.mxu0 0.0
        %608 = vmatpush.msra.mxu0 0.0
        %609 = vmatpush.msra.mxu0 0.0
        %610 = vmatpush.msra.mxu0 0.0
        %611 = vmatpush.msra.mxu0 0.0
        %612 = vmatpush.msra.mxu0 0.0
        %613 = vmatpush.msra.mxu0 0.0
        %614 = vmatpush.msra.mxu0 0.0
        %615 = vmatpush.msra.mxu0 0.0
        %616 = vmatpush.msra.mxu0 0.0
        %617 = vmatpush.msra.mxu0 0.0
        %618 = vmatpush.msra.mxu0 0.0
        %619 = vmatpush.msra.mxu0 %v600
        %620 = vmatpush.msra.mxu0 %v597
        %621 = vmatpush.msra.mxu0 %v594
        %622 = vmatmul.f32.gmra.mxu0 %v604
        %v623 = vpop.f32.mrf.mxu0
        %v624 = vadd.f32 0.0, %v623
        %625 = vdwg.mxu0
        %626 = vmatpush.msra.mxu0 0.0
        %627 = vmatpush.msra.mxu0 0.0
        %628 = vmatpush.msra.mxu0 0.0
        %629 = vmatpush.msra.mxu0 0.0
        %630 = vmatpush.msra.mxu0 0.0
        %631 = vmatpush.msra.mxu0 0.0
        %632 = vmatpush.msra.mxu0 0.0
        %633 = vmatpush.msra.mxu0 0.0
        %634 = vmatpush.msra.mxu0 0.0
        %635 = vmatpush.msra.mxu0 0.0
        %636 = vmatpush.msra.mxu0 0.0
        %637 = vmatpush.msra.mxu0 0.0
        %638 = vmatpush.msra.mxu0 0.0
        %639 = vmatpush.msra.mxu0 %v601
        %640 = vmatpush.msra.mxu0 %v598
        %641 = vmatpush.msra.mxu0 %v595
        %642 = vmatmul.f32.gmra.mxu0 %v604
        %v643 = vpop.f32.mrf.mxu0
        %v644 = vadd.f32 0.0, %v643
        %645 = vdwg.mxu0
        %646 = vmatpush.msra.mxu0 0.0
        %647 = vmatpush.msra.mxu0 0.0
        %648 = vmatpush.msra.mxu0 0.0
        %649 = vmatpush.msra.mxu0 0.0
        %650 = vmatpush.msra.mxu0 0.0
        %651 = vmatpush.msra.mxu0 0.0
        %652 = vmatpush.msra.mxu0 0.0
        %653 = vmatpush.msra.mxu0 0.0
        %654 = vmatpush.msra.mxu0 0.0
        %655 = vmatpush.msra.mxu0 0.0
        %656 = vmatpush.msra.mxu0 0.0
        %657 = vmatpush.msra.mxu0 0.0
        %658 = vmatpush.msra.mxu0 0.0
        %659 = vmatpush.msra.mxu0 %v602
        %660 = vmatpush.msra.mxu0 %v599
        %661 = vmatpush.msra.mxu0 %v596
        %662 = vmatmul.f32.gmra.mxu0 %v604
        %v663 = vpop.f32.mrf.mxu0
        %v664 = vadd.f32 0.0, %v663
        %665 = vdwg.mxu0
        %v666 = vmax.f32 %v624, 0.0
        %v667 = vmax.f32 %v644, 0.0
        %v668 = vmax.f32 %v664, 0.0
        %v669 = vld [vmem:[%s4 + $0x8] sm:$0xff]
        %671 = vset.pattern.permute.xlu0 0
        %672 = vperm.xlu0 %671, %v669
        %v673 = vpop.permute.xlu0 %672
        %v675 = vmul.f32 %v666, %v673
        %v676 = vmul.f32 %v667, %v673
        %v677 = vmul.f32 %v668, %v673
        %v678 = vld [vmem:[%s5 + $0x8] sm:$0xff]
        %680 = vset.pattern.permute.xlu0 0
        %681 = vperm.xlu0 %680, %v678
        %v682 = vpop.permute.xlu0 %681
        %v684 = vadd.f32 %v675, %v682
        %v685 = vadd.f32 %v676, %v682
        %v686 = vadd.f32 %v677, %v682
        %687 = vst [vmem:[%s393 + $0x8] sm:$0xff] %v685
        %v688 = vld [vmem:[%s344 + $0x10] sm:$0xff]
        %v689 = vld [vmem:[%s334 + $0x10] sm:$0xff]
        %v690 = vld [vmem:[%s354 + $0x10] sm:$0xff]
        %v691 = vadd.f32 %v684, %v688
        %v692 = vadd.f32 %v685, %v689
        %v693 = vadd.f32 %v686, %v690
        %v694 = vsel %vm422, %v691, 0.0
        %v695 = vsel %vm423, %v692, 0.0
        %v696 = vsel %vm424, %v693, 0.0
        %697 = vrot.lane.b32.xlu0 %v694, 1
        %v698 = vpop.permute.xlu0 %697
        %699 = vrot.lane.b32.xlu0 %v695, 1
        %v700 = vpop.permute.xlu0 %699
        %701 = vrot.lane.b32.xlu0 %v696, 1
        %v702 = vpop.permute.xlu0 %701
        %v703 = vsel %vm437, %v700, %v702
        %v704 = vsel %vm437, %v698, %v700
        %v705 = vsel %vm437, %v702, %v698
        %706 = vst [vmem:[#allocation2] sm:$0xff] %v705
        %707 = vst [vmem:[#allocation2 + $0x8] sm:$0xff] %v704
        %708 = vst [vmem:[#allocation2 + $0x10] sm:$0xff] %v703
        %709 = vst [vmem:[#allocation2 + $0x18] sm:$0xff] %v694
        %710 = vst [vmem:[#allocation2 + $0x20] sm:$0xff] %v695
        %711 = vst [vmem:[#allocation2 + $0x28] sm:$0xff] %v696
        %712 = vrot.lane.b32.xlu0 %v694, 127
        %v713 = vpop.permute.xlu0 %712
        %714 = vrot.lane.b32.xlu0 %v695, 127
        %v715 = vpop.permute.xlu0 %714
        %716 = vrot.lane.b32.xlu0 %v696, 127
        %v717 = vpop.permute.xlu0 %716
        %v718 = vsel %vm453, %v715, %v717
        %v719 = vsel %vm453, %v713, %v715
        %v720 = vsel %vm453, %v717, %v713
        %721 = vst [vmem:[#allocation2 + $0x30] sm:$0xff] %v719
        %722 = vst [vmem:[#allocation2 + $0x38] sm:$0xff] %v718
        %723 = vst [vmem:[#allocation2 + $0x40] sm:$0xff] %v720
        %s724 = scalar_lea.vmem %s3, 16
        %v725 = vld [vmem:[%s724] sm:$0xff]
        %v726 = vld [vmem:[#allocation2 + $0x8] sm:$0xff]
        %v727 = vld [vmem:[#allocation2 + $0x20] sm:$0xff]
        %v728 = vld [vmem:[#allocation2 + $0x38] sm:$0xff]
        %v730 = vsel %vm470, %v725, 0
        %732 = vmatpush.msra.mxu0 0.0
        %733 = vmatpush.msra.mxu0 0.0
        %734 = vmatpush.msra.mxu0 0.0
        %735 = vmatpush.msra.mxu0 0.0
        %736 = vmatpush.msra.mxu0 0.0
        %737 = vmatpush.msra.mxu0 0.0
        %738 = vmatpush.msra.mxu0 0.0
        %739 = vmatpush.msra.mxu0 0.0
        %740 = vmatpush.msra.mxu0 0.0
        %741 = vmatpush.msra.mxu0 0.0
        %742 = vmatpush.msra.mxu0 0.0
        %743 = vmatpush.msra.mxu0 0.0
        %744 = vmatpush.msra.mxu0 0.0
        %745 = vmatpush.msra.mxu0 %v728
        %746 = vmatpush.msra.mxu0 %v727
        %747 = vmatpush.msra.mxu0 %v726
        %748 = vmatmul.f32.gmra.mxu0 %v730
        %v749 = vpop.f32.mrf.mxu0
        %v750 = vadd.f32 0.0, %v749
        %751 = vdwg.mxu0
        %v752 = vmax.f32 %v750, 0.0
        %v753 = vld [vmem:[%s4 + $0x10] sm:$0xff]
        %755 = vset.pattern.permute.xlu0 0
        %756 = vperm.xlu0 %755, %v753
        %v757 = vpop.permute.xlu0 %756
        %v759 = vmul.f32 %v752, %v757
        %v760 = vld [vmem:[%s5 + $0x10] sm:$0xff]
        %762 = vset.pattern.permute.xlu0 0
        %763 = vperm.xlu0 %762, %v760
        %v764 = vpop.permute.xlu0 %763
        %v766 = vadd.f32 %v759, %v764
        %767 = vst [vmem:[%s393 + $0x10] sm:$0xff] %v766
        %v768 = vld [vmem:[%s334 + $0x18] sm:$0xff]
        %769 = vst [vmem:[%s393 + $0x18] sm:$0xff] %v768
        %s770 = sand.u32 %s207, 1
        %s771 = scalar_lea.sflag [#allocation5], %s770
        %s772 = sand.u32 %s207, 1
        %s773 = smul.addr %s772, 32
        %s774 = scalar_lea.vmem [#allocation9], %s773
        // Predicated region
        $region57: #{tpu_custom_call.1} parent=43 // pred_check
          %p775 = pneg %p217
        $region58: #{tpu_custom_call.1} parent=43 // pred_check_branch
          %777 = sbr.rel (%p775) target = $region60
        $region59: #{tpu_custom_call.1} parent=43 // pred_region
          %779 = vsyncadd %s771, 0
          %s780 = smul.addr %s30, 12
          %s781 = sadd.s32 %s31, %s780
          %s782 = smul.addr %s781, 8
          %s783 = scalar_lea.hbm %s6, %s782
          %s784 = sshll.u32 %s774, 4
          %s785 = int_to_ptr.vmem [resolvable:$true] %s784
          %s786 = sshll.u32 %s783, 4
          %s787 = int_to_ptr.hbm [resolvable:$true] %s786
          %792 = dma.vmem_to_hbm [thread:$0]  %s785, 512, %s787, %s771, 128, 384, 8
        $region60: #{tpu_custom_call.1} parent=43 // pred_fallthru
          _
      $region44: #{tpu_custom_call.1} parent=5 // pred_fallthru
        _
      %p793 = scmp.le.s32.totalorder 2, %s21
      // Predicated region
      $region61: #{tpu_custom_call.1} parent=5 // pred_check
        %p794 = pneg %p793
      $region62: #{tpu_custom_call.1} parent=5 // pred_check_branch
        %796 = sbr.rel (%p794) target = $region64
      $region63: #{tpu_custom_call.1} parent=5 // pred_region
        %s797 = ssub.s32 %s21, 2
        // Predicated region
        $region65: #{tpu_custom_call.1} parent=63 // pred_check
          %p798 = pneg %p223
        $region66: #{tpu_custom_call.1} parent=63 // pred_check_branch
          %800 = sbr.rel (%p798) target = $region68
        $region67: #{tpu_custom_call.1} parent=63 // pred_region
          %s801 = sand.u32 %s208, 1
          %s802 = scalar_lea.sflag [#allocation5], %s801
          %s803 = sand.u32 %s208, 1
          %s804 = smul.addr %s803, 32
          %s805 = scalar_lea.vmem [#allocation9], %s804
          %807 = dma.done %s802, 512
        $region68: #{tpu_custom_call.1} parent=63 // pred_fallthru
          _
      $region64: #{tpu_custom_call.1} parent=5 // pred_fallthru
        _
    $region6: #{tpu_custom_call.1} parent=1 // loop_footer
      %s25 = sadd.s32 1, %s21
    $region7: #{tpu_custom_call.1} parent=1 // loop_footer_branch
      %20 = sbr.rel target = $region3
    $region8: #{tpu_custom_call.1} parent=1 // loop_exit
      _
    %808 = vsyncpa [#allocation4], 1
    %s809 = scalar_lea.sflag [#allocation4], 1
    %810 = vsyncpa %s809, 1
    %811 = vsyncpa [#allocation7], 1
    %s812 = scalar_lea.sflag [#allocation7], 1
    %813 = vsyncpa %s812, 1
    %814 = vsyncpa [#allocation5], 1
    %s815 = scalar_lea.sflag [#allocation5], 1
    %816 = vsyncpa %s815, 1

</llo_original>
